<compile_context>
chip_gen: v6e
topology: v6e:2x2x1
jax: 0.10.0
libtpu: 0.0.40
codegen_flags: <defaults>
</compile_context>

<pallas_src>
import functools

import jax
import jax.numpy as jnp
from jax.experimental import pallas as pl
from jax.experimental.pallas import tpu as pltpu


# ----------------------------------------------------------------------------
# Pallas kernels
# ----------------------------------------------------------------------------

def _actnorm_stats_kernel(z_ref, m_ref, s1_ref, s2_ref):
    """Masked per-channel sum and sum-of-squares, accumulated over the (B, T-tile) grid.
    Only used for flow 0; later flows get their stats fused into the previous flow."""
    @pl.when((pl.program_id(0) == 0) & (pl.program_id(1) == 0))
    def _():
        s1_ref[...] = jnp.zeros_like(s1_ref)
        s2_ref[...] = jnp.zeros_like(s2_ref)

    z = z_ref[0]                       # (C, TB)
    zm = z * m_ref[0]                  # (C, TB)
    s1_ref[...] += jnp.sum(zm, axis=1, keepdims=True)
    s2_ref[...] += jnp.sum(zm * z, axis=1, keepdims=True)


def _flow_kernel(z_ref, m_ref, sc_ref, ab_ref, wc_ref, bs_ref,
                 wi_ref, bi_ref, wr_ref, br_ref, we_ref, be_ref,
                 zo_ref, ls_ref, s1_ref, s2_ref,
                 zi_st, x_st, acc_st, *, C, C2, H, K, pad):
    """One fully fused Glow flow.  Grid = (batch, WN layer).

    l == 0        : ActNorm apply + [invertible 1x1 conv ; coupling `start` conv]
                    (one stacked matmul), results parked in VMEM scratch.
    every l       : one WaveNet layer (im2col conv via pltpu.roll taps + gated act
                    + residual/skip 1x1), hidden state + skip acc carried in scratch.
    l == L-1      : `end` 1x1 conv + affine transform of z0 + z1 pass-through (concat)
                    + masked log-det rows + next-flow ActNorm masked stats.
    """
    l = pl.program_id(1)
    m = m_ref[0]                                                     # (1, TP)

    @pl.when(l == 0)
    def _():
        z = z_ref[0]                                                 # (C, TP)
        zn = (z * sc_ref[...] + ab_ref[...]) * m                     # ActNorm apply
        zih = jnp.dot(wc_ref[...], zn.astype(jnp.bfloat16),
                      preferred_element_type=jnp.float32)            # (C+H, TP)
        zi_st[...] = zih[:C, :] * m                                  # inv 1x1 conv out
        x_st[...] = (zih[C:, :] + bs_ref[...]) * m                   # `start` conv out
        acc_st[...] = jnp.zeros_like(acc_st)

    # ---------------- one WaveNet layer ----------------
    x = x_st[...]                                                    # (H, TP) f32
    xb = x.astype(jnp.bfloat16)                                      # cast once per layer
    TP = x.shape[1]
    taps = []
    for k in range(K):
        shift = (pad - k) % TP
        taps.append(pltpu.roll(xb, shift=shift, axis=1) if shift != 0 else xb)
    cat = taps[0] if K == 1 else jnp.concatenate(taps, axis=0)       # (K*H, TP) bf16
    # Circular wrap lands in the zero-masked tail (TP >= Ts + pad), so this matches
    # Conv1d zero padding.
    xin = jnp.dot(wi_ref[l], cat, preferred_element_type=jnp.float32) + bi_ref[l]
    # gated activation; sigmoid(x) = 0.5*(1 + tanh(0.5 x)) -> single EUP push per elem
    acts = jnp.tanh(xin[:H, :]) * (0.5 * (1.0 + jnp.tanh(0.5 * xin[H:, :])))
    # TODO(synk): nn.Dropout(p=0.05) on `acts` omitted (eval-mode identity).
    rs = jnp.dot(wr_ref[l], acts.astype(jnp.bfloat16),
                 preferred_element_type=jnp.float32) + br_ref[l]     # (2H, TP)
    x_st[...] = (x + rs[:H, :]) * m        # residual (last layer: res half zero-padded)
    acc_st[...] = acc_st[...] + rs[H:, :]  # skip accumulate

    @pl.when(l == pl.num_programs(1) - 1)
    def _():
        skip = acc_st[...] * m                                        # final output * mask
        p = jnp.dot(we_ref[...], skip.astype(jnp.bfloat16),
                    preferred_element_type=jnp.float32) + be_ref[...]  # (C, TP)
        t = p[:C2, :]
        logs = p[C2:, :]
        zi = zi_st[...]
        z0n = (zi[:C2, :] * jnp.exp(logs) + t) * m
        zout = jnp.concatenate([z0n, zi[C2:, :]], axis=0)             # (C, TP), masked
        zo_ref[0] = zout
        ls_ref[0] = jnp.sum(logs * m, axis=0, keepdims=True)          # (1, TP) log-det rows
        # next-flow ActNorm masked stats (per-batch partials, reduced over B in JAX glue)
        s1_ref[0] = jnp.sum(zout, axis=1, keepdims=True)              # (C, 1)
        s2_ref[0] = jnp.sum(zout * zout, axis=1, keepdims=True)       # (C, 1)


# ----------------------------------------------------------------------------
# Pallas wrappers
# ----------------------------------------------------------------------------

def _round_up(x, m):
    return ((x + m - 1) // m) * m


def actnorm_stats(z, mask, TB):
    B, C, TP = z.shape
    return pl.pallas_call(
        _actnorm_stats_kernel,
        out_shape=(jax.ShapeDtypeStruct((C, 1), jnp.float32),
                   jax.ShapeDtypeStruct((C, 1), jnp.float32)),
        grid=(B, TP // TB),
        in_specs=[pl.BlockSpec((1, C, TB), lambda b, t: (b, 0, t)),
                  pl.BlockSpec((1, 1, TB), lambda b, t: (b, 0, t))],
        out_specs=(pl.BlockSpec((C, 1), lambda b, t: (0, 0)),
                   pl.BlockSpec((C, 1), lambda b, t: (0, 0))),
        compiler_params=pltpu.CompilerParams(
            dimension_semantics=("arbitrary", "arbitrary")),
    )(z, mask)


def _flow_vmem_limit(C, H, L, K, TP):
    """Scoped-VMEM request derived from the actual fused-flow footprint (+ headroom),
    capped safely below v7x's 64 MiB physical VMEM."""
    f32, bf16 = 4, 2
    act = (2 * C + 2 + 2 * C + 2) * TP * f32          # dbl-buffered z-in, mask, z-out, lsum
    scr = (C + 2 * H) * TP * f32                      # zi / hidden / skip scratch
    wts = 2 * ((C + H) * C + L * 2 * H * (K * H + H) + C * H) * bf16
    wts += 2 * (2 * C + H + 4 * L * H + 3 * C) * f32  # small f32 params / stat outputs
    need = act + scr + wts
    return int(min(max(32 * 1024 * 1024, need * 1.4 + (4 << 20)), 56 * 1024 * 1024))


def flow_step(z, mask, scale, bias, p, K, vmem_limit):
    """One fused Glow flow: returns (z_out, logdet rows, next-flow stat partials)."""
    B, C, TP = z.shape
    H = p['start_b'].shape[0]
    L = p['wi_s'].shape[0]
    C2 = C // 2
    pad = (K - 1) // 2
    kernel = functools.partial(_flow_kernel, C=C, C2=C2, H=H, K=K, pad=pad)
    return pl.pallas_call(
        kernel,
        out_shape=(jax.ShapeDtypeStruct((B, C, TP), jnp.float32),
                   jax.ShapeDtypeStruct((B, 1, TP), jnp.float32),
                   jax.ShapeDtypeStruct((B, C, 1), jnp.float32),
                   jax.ShapeDtypeStruct((B, C, 1), jnp.float32)),
        grid=(B, L),
        in_specs=[pl.BlockSpec((1, C, TP), lambda b, l: (b, 0, 0)),      # z (once per b)
                  pl.BlockSpec((1, 1, TP), lambda b, l: (b, 0, 0)),      # mask
                  pl.BlockSpec((C, 1), lambda b, l: (0, 0)),             # ActNorm scale
                  pl.BlockSpec((C, 1), lambda b, l: (0, 0)),             # ActNorm bias
                  pl.BlockSpec((C + H, C), lambda b, l: (0, 0)),         # [W_inv ; W_start@W_inv]
                  pl.BlockSpec((H, 1), lambda b, l: (0, 0)),             # start bias
                  # full WN weight stacks VMEM-resident; indexed in-kernel with program_id(1)
                  pl.BlockSpec((L, 2 * H, K * H), lambda b, l: (0, 0, 0)),
                  pl.BlockSpec((L, 2 * H, 1), lambda b, l: (0, 0, 0)),
                  pl.BlockSpec((L, 2 * H, H), lambda b, l: (0, 0, 0)),
                  pl.BlockSpec((L, 2 * H, 1), lambda b, l: (0, 0, 0)),
                  pl.BlockSpec((C, H), lambda b, l: (0, 0)),             # end weight
                  pl.BlockSpec((C, 1), lambda b, l: (0, 0))],            # end bias
        out_specs=(pl.BlockSpec((1, C, TP), lambda b, l: (b, 0, 0)),
                   pl.BlockSpec((1, 1, TP), lambda b, l: (b, 0, 0)),
                   pl.BlockSpec((1, C, 1), lambda b, l: (b, 0, 0)),
                   pl.BlockSpec((1, C, 1), lambda b, l: (b, 0, 0))),
        scratch_shapes=[pltpu.VMEM((C, TP), jnp.float32),                # z_i (inv conv out)
                        pltpu.VMEM((H, TP), jnp.float32),                # WN hidden state
                        pltpu.VMEM((H, TP), jnp.float32)],               # WN skip accumulator
        compiler_params=pltpu.CompilerParams(
            dimension_semantics=("parallel", "arbitrary"),
            vmem_limit_bytes=vmem_limit),
    )(z, mask, scale, bias, p['w_comb'], p['start_b'],
      p['wi_s'], p['bi_s'], p['wr_s'], p['br_s'], p['end_w'], p['end_b'])


# ----------------------------------------------------------------------------
# Module composition (plain-JAX glue around the kernels)
# ----------------------------------------------------------------------------

def glow_forward(z, z_mask, params, num_flows, num_layers, kernel_size, n_sqz=2):
    b, c, t = z.shape
    # ---- squeeze (reshape/permute glue, identical to Glow.squeeze) ----
    t_s = (t // n_sqz) * n_sqz
    zs = z[:, :, :t_s]
    zs = zs.reshape(b, c, t_s // n_sqz, n_sqz).transpose(0, 3, 1, 2).reshape(
        b, c * n_sqz, t_s // n_sqz)
    m_s = z_mask[:, :, n_sqz - 1::n_sqz]
    zs = zs * m_s
    Ts = t_s // n_sqz
    C = c * n_sqz
    H = params[0]['start_b'].shape[0]
    L = num_layers

    # ---- pad time to a lane-dense multiple of 128; padded tail has mask = 0 (same
    #      mechanism as the length mask) and also provides the >= pad_conv trailing
    #      zero columns that make roll-based conv taps match Conv1d zero padding. ----
    pad_conv = (kernel_size - 1) // 2
    TP0 = _round_up(max(Ts + pad_conv, 1), 128)
    if TP0 <= 512:
        TB = TP0                      # single big time tile for the stats kernel
        TP = TP0
    else:
        TB = 512
        TP = _round_up(TP0, TB)
    z_p = jnp.pad(zs, ((0, 0), (0, 0), (0, TP - Ts)))
    m_p = jnp.pad(m_s, ((0, 0), (0, 0), (0, TP - Ts)))

    length = jnp.sum(m_p, axis=(1, 2))          # (B,)  flow-invariant
    denom = jnp.sum(length)                     # scalar
    ldj = jnp.zeros((b,), jnp.float32)

    vmem_limit = _flow_vmem_limit(C, H, L, kernel_size, TP)

    s1 = s2 = None
    for f in range(num_flows):
        p = params[f]
        # --- ActNorm data-dependent init (masked stats) -----------------------------
        # NOTE: matches PyTorch first-call (initialization) forward; a trained ActNorm
        # would use stored log_scale/bias instead.
        if f == 0:
            s1, s2 = actnorm_stats(z_p, m_p, TB)          # standalone only for flow 0
        mean = s1 / denom
        var = s2 / denom - mean * mean
        logs = 0.5 * jnp.log(jnp.maximum(var, 1e-6))
        log_scale = -logs                                  # (C, 1)
        scale = jnp.exp(log_scale)                         # precomputed (no per-tile exp)
        bias = -mean * scale
        ldj = ldj + (jnp.sum(log_scale) + p['inv_sld']) * length
        # --- fully fused flow (ActNorm apply + inv 1x1 + coupling start/WN/end) -----
        z_p, lsum, s1b, s2b = flow_step(z_p, m_p, scale, bias, p, kernel_size, vmem_limit)
        ldj = ldj + jnp.sum(lsum, axis=(1, 2))
        # per-batch stat partials of the NEW z_p -> stats for the next flow's ActNorm
        s1 = jnp.sum(s1b, axis=0)
        s2 = jnp.sum(s2b, axis=0)

    zs = z_p[:, :, :Ts]
    # ---- unsqueeze (identical to Glow.unsqueeze) ----
    z_u = zs.reshape(b, n_sqz, C // n_sqz, Ts).transpose(0, 2, 3, 1).reshape(
        b, C // n_sqz, Ts * n_sqz)
    m_u = jnp.repeat(m_s[..., None], n_sqz, axis=-1).reshape(b, 1, Ts * n_sqz)
    z_u = z_u * m_u
    return z_u, ldj, m_u


# ----------------------------------------------------------------------------
# Parameters
# ----------------------------------------------------------------------------

def init_params(key, C, H, K, num_flows, num_layers):
    """Raw (torch-layout) parameters.  C = in_channels * n_sqz, H = hidden channels."""
    C2 = C // 2
    params = []
    for _ in range(num_flows):
        key, k0, k1, k2, k3, k4 = jax.random.split(key, 6)
        p = {}
        p['inv_w'] = jnp.linalg.qr(jax.random.normal(k0, (C, C), jnp.float32))[0]
        p['start_v'] = 0.1 * jax.random.normal(k1, (H, C2, 1), jnp.float32)
        p['start_g'] = jnp.ones((H, 1, 1), jnp.float32)
        p['start_b'] = 0.1 * jax.random.normal(k2, (H,), jnp.float32)
        for i in range(num_layers):
            key, ka, kb, kc, kd = jax.random.split(key, 5)
            p[f'in_w_{i}'] = 0.1 * jax.random.normal(ka, (2 * H, H, K), jnp.float32)
            p[f'in_b_{i}'] = 0.1 * jax.random.normal(kb, (2 * H,), jnp.float32)
            RS = 2 * H if i < num_layers - 1 else H
            p[f'rs_w_{i}'] = 0.1 * jax.random.normal(kc, (RS, H), jnp.float32)
            p[f'rs_b_{i}'] = 0.1 * jax.random.normal(kd, (RS,), jnp.float32)
        # NOTE: PyTorch zero-inits the `end` conv; small random values used here so the
        # affine-transform / log-det path does nontrivial work.
        p['end_w'] = 0.1 * jax.random.normal(k3, (C, H), jnp.float32)
        p['end_b'] = 0.1 * jax.random.normal(k4, (C,), jnp.float32)
        params.append(p)
    return params


def prep_params(params, C, H, K, num_layers):
    """One-time weight prep: weight-norm resolve, stacked [W_inv ; W_start@W_inv[C2:]]
    matrix, im2col reshape of conv taps, layer stacking for the fused flow kernel,
    bf16 casts for MXU operands, slogdet glue."""
    C2 = C // 2
    prepped = []
    for p in params:
        q = {}
        q['inv_sld'] = jnp.linalg.slogdet(p['inv_w'])[1].astype(jnp.float32)
        v, g = p['start_v'], p['start_g']
        w_start = (g * v / jnp.sqrt(jnp.sum(v * v, axis=(1, 2), keepdims=True)))[:, :, 0]
        # stacked matmul: top C rows -> invertible 1x1 conv, bottom H rows -> start conv
        # NOTE: inv 1x1 conv runs in bf16 while its log-det uses f32 slogdet (tiny mismatch).
        q['w_comb'] = jnp.concatenate(
            [p['inv_w'], w_start @ p['inv_w'][C2:, :]], axis=0).astype(jnp.bfloat16)
        q['start_b'] = p['start_b'].reshape(H, 1)
        wi, bi, wr, br = [], [], [], []
        for i in range(num_layers):
            w = p[f'in_w_{i}']                                             # (2H, H, K)
            wi.append(jnp.transpose(w, (0, 2, 1)).reshape(2 * H, K * H))   # im2col layout
            bi.append(p[f'in_b_{i}'].reshape(2 * H, 1))
            rw, rb = p[f'rs_w_{i}'], p[f'rs_b_{i}']
            if rw.shape[0] == H:        # last layer: skip-only -> zero-pad the res half
                rw = jnp.concatenate([jnp.zeros((H, H), jnp.float32), rw], axis=0)
                rb = jnp.concatenate([jnp.zeros((H,), jnp.float32), rb], axis=0)
            wr.append(rw)
            br.append(rb.reshape(2 * H, 1))
        q['wi_s'] = jnp.stack(wi).astype(jnp.bfloat16)                     # (L, 2H, K*H)
        q['bi_s'] = jnp.stack(bi)                                          # (L, 2H, 1)
        q['wr_s'] = jnp.stack(wr).astype(jnp.bfloat16)                     # (L, 2H, H)
        q['br_s'] = jnp.stack(br)                                          # (L, 2H, 1)
        q['end_w'] = p['end_w'].astype(jnp.bfloat16)                       # (C, H)
        q['end_b'] = p['end_b'].reshape(C, 1)
        prepped.append(q)
    return prepped


# ----------------------------------------------------------------------------

if __name__ == "__main__":
    B, in_channels, T = 2, 4, 16
    hidden = 16          # `channels`
    kernel_size = 3
    num_flows = 2
    num_layers = 2
    n_sqz = 2

    key = jax.random.PRNGKey(0)
    kz, kp = jax.random.split(key)
    z = jax.random.normal(kz, (B, in_channels, T), jnp.float32)
    lengths = jnp.array([16, 12])
    z_mask = (jnp.arange(T)[None, :] < lengths[:, None]).astype(jnp.float32).reshape(B, 1, T)

    C = in_channels * n_sqz
    raw_params = init_params(kp, C, hidden, kernel_size, num_flows, num_layers)
    params = prep_params(raw_params, C, hidden, kernel_size, num_layers)

    z_out, log_df_dz, mask_out = glow_forward(z, z_mask, params, num_flows,
                                              num_layers, kernel_size, n_sqz)
    jax.block_until_ready((z_out, log_df_dz, mask_out))

    assert z_out.shape == (B, in_channels, T)
    assert log_df_dz.shape == (B,)
    assert mask_out.shape == (B, 1, T)
    assert bool(jnp.all(jnp.isfinite(z_out))) and bool(jnp.all(jnp.isfinite(log_df_dz)))
    print("KERNEL_OK")
</pallas_src>

<mosaic_0001>
module attributes {stable_mosaic.version = 11 : i64} {
  func.func @_actnorm_stats_kernel(%arg0: i32, %arg1: i32, %arg2: memref<1x8x128xf32, #tpu.memory_space<vmem>>, %arg3: memref<1x1x128xf32, #tpu.memory_space<vmem>>, %arg4: memref<8x1xf32, #tpu.memory_space<vmem>>, %arg5: memref<8x1xf32, #tpu.memory_space<vmem>>) attributes {dimension_semantics = [#tpu.dimension_semantics<arbitrary>, #tpu.dimension_semantics<arbitrary>], iteration_bounds = array<i64: 2, 1>, scalar_prefetch = 0 : i64, scratch_operands = 0 : i64, tpu.core_type = #tpu.core_type<tc>, window_params = [{transform_indices = @transform_0, window_bounds = array<i64: 1, 8, 128>}, {transform_indices = @transform_1, window_bounds = array<i64: 1, 1, 128>}, {pipeline_mode = #tpu.pipeline_mode<synchronous>, transform_indices = @transform_2, window_bounds = array<i64: 8, 1>}, {pipeline_mode = #tpu.pipeline_mode<synchronous>, transform_indices = @transform_3, window_bounds = array<i64: 8, 1>}]} {
    %c0_i32 = arith.constant 0 : i32
    %0 = arith.cmpi eq, %arg0, %c0_i32 : i32
    %c0_i32_0 = arith.constant 0 : i32
    %1 = arith.cmpi eq, %arg1, %c0_i32_0 : i32
    %2 = arith.andi %0, %1 : i1
    %3 = arith.extui %2 : i1 to i32
    %c0_i32_1 = arith.constant 0 : i32
    %4 = arith.cmpi ne, %3, %c0_i32_1 : i32
    scf.if %4 {
      %cst_16 = arith.constant 0.000000e+00 : f32
      %22 = vector.broadcast %cst_16 : f32 to vector<8x1xf32>
      %c0_17 = arith.constant 0 : index
      %c0_18 = arith.constant 0 : index
      %23 = vector.load %arg4[%c0_17, %c0_18] : memref<8x1xf32, #tpu.memory_space<vmem>>, vector<8x1xf32>
      tpu.vector_store %arg4[%c0_17, %c0_18], %22 {strides = array<i32>} : memref<8x1xf32, #tpu.memory_space<vmem>>, vector<8x1xf32>,
      %cst_19 = arith.constant 0.000000e+00 : f32
      %24 = vector.broadcast %cst_19 : f32 to vector<8x1xf32>
      %c0_20 = arith.constant 0 : index
      %c0_21 = arith.constant 0 : index
      %25 = vector.load %arg5[%c0_20, %c0_21] : memref<8x1xf32, #tpu.memory_space<vmem>>, vector<8x1xf32>
      tpu.vector_store %arg5[%c0_20, %c0_21], %24 {strides = array<i32>} : memref<8x1xf32, #tpu.memory_space<vmem>>, vector<8x1xf32>,
    } else {
    }
    %c0 = arith.constant 0 : index
    %c0_2 = arith.constant 0 : index
    %c0_3 = arith.constant 0 : index
    %5 = vector.load %arg2[%c0, %c0_2, %c0_3] : memref<1x8x128xf32, #tpu.memory_space<vmem>>, vector<1x8x128xf32>
    %6 = vector.shape_cast %5 : vector<1x8x128xf32> to vector<8x128xf32>
    %c0_4 = arith.constant 0 : index
    %c0_5 = arith.constant 0 : index
    %c0_6 = arith.constant 0 : index
    %7 = vector.load %arg3[%c0_4, %c0_5, %c0_6] : memref<1x1x128xf32, #tpu.memory_space<vmem>>, vector<1x1x128xf32>
    %8 = vector.shape_cast %7 : vector<1x1x128xf32> to vector<1x128xf32>
    %9 = vector.broadcast %8 : vector<1x128xf32> to vector<8x128xf32>
    %10 = arith.mulf %6, %9 : vector<8x128xf32>
    %c0_7 = arith.constant 0 : index
    %c0_8 = arith.constant 0 : index
    %11 = vector.load %arg4[%c0_7, %c0_8] : memref<8x1xf32, #tpu.memory_space<vmem>>, vector<8x1xf32>
    %cst = arith.constant dense<0.000000e+00> : vector<8xf32>
    %12 = vector.multi_reduction <add>, %10, %cst [1] : vector<8x128xf32> to vector<8xf32>
    %13 = vector.shape_cast %12 : vector<8xf32> to vector<8x1xf32>
    %14 = arith.addf %11, %13 : vector<8x1xf32>
    %c0_9 = arith.constant 0 : index
    %c0_10 = arith.constant 0 : index
    %15 = vector.load %arg4[%c0_9, %c0_10] : memref<8x1xf32, #tpu.memory_space<vmem>>, vector<8x1xf32>
    tpu.vector_store %arg4[%c0_9, %c0_10], %14 {strides = array<i32>} : memref<8x1xf32, #tpu.memory_space<vmem>>, vector<8x1xf32>,
    %c0_11 = arith.constant 0 : index
    %c0_12 = arith.constant 0 : index
    %16 = vector.load %arg5[%c0_11, %c0_12] : memref<8x1xf32, #tpu.memory_space<vmem>>, vector<8x1xf32>
    %17 = arith.mulf %10, %6 : vector<8x128xf32>
    %cst_13 = arith.constant dense<0.000000e+00> : vector<8xf32>
    %18 = vector.multi_reduction <add>, %17, %cst_13 [1] : vector<8x128xf32> to vector<8xf32>
    %19 = vector.shape_cast %18 : vector<8xf32> to vector<8x1xf32>
    %20 = arith.addf %16, %19 : vector<8x1xf32>
    %c0_14 = arith.constant 0 : index
    %c0_15 = arith.constant 0 : index
    %21 = vector.load %arg5[%c0_14, %c0_15] : memref<8x1xf32, #tpu.memory_space<vmem>>, vector<8x1xf32>
    tpu.vector_store %arg5[%c0_14, %c0_15], %20 {strides = array<i32>} : memref<8x1xf32, #tpu.memory_space<vmem>>, vector<8x1xf32>,
    return
  }
  func.func @transform_0(%arg0: i32, %arg1: i32) -> (i32, i32, i32) {
    %c0_i32 = arith.constant 0 : i32
    %c0_i32_0 = arith.constant 0 : i32
    return %arg0, %c0_i32, %arg1 : i32, i32, i32
  }
  func.func @transform_1(%arg0: i32, %arg1: i32) -> (i32, i32, i32) {
    %c0_i32 = arith.constant 0 : i32
    %c0_i32_0 = arith.constant 0 : i32
    return %arg0, %c0_i32, %arg1 : i32, i32, i32
  }
  func.func @transform_2(%arg0: i32, %arg1: i32) -> (i32, i32) {
    %c0_i32 = arith.constant 0 : i32
    %c0_i32_0 = arith.constant 0 : i32
    %c0_i32_1 = arith.constant 0 : i32
    return %c0_i32, %c0_i32_0 : i32, i32
  }
  func.func @transform_3(%arg0: i32, %arg1: i32) -> (i32, i32) {
    %c0_i32 = arith.constant 0 : i32
    %c0_i32_0 = arith.constant 0 : i32
    %c0_i32_1 = arith.constant 0 : i32
    return %c0_i32, %c0_i32_0 : i32, i32
  }
}

</mosaic_0001>

<llo_original>
// kernel: tpu_custom_call.1
$region0: #{tpu_custom_call.1}
  #allocation0 [shape = 'u32[]', space=smem, size = 0x4, offset = 0x4, fixed_abs, tag = 'smem constant byte address 0x4 - core index']
  #allocation1 [shape = 'u32[144,128]{1,0:T(1,128)}', space=vmem, size = 0x12000, scoped, tag = 'internal scratch']
  %s0 = inlined_call_operand.hbm [shape: f32[2,8,128], index: 0, kind: input, shape index: {}]
  %s1 = inlined_call_operand.hbm [shape: f32[2,1,128], index: 1, kind: input, shape index: {}]
  %s2 = inlined_call_operand.vmem [shape: f32[8,1], index: 2, kind: output, shape index: {0}]
  %s3 = inlined_call_operand.vmem [shape: f32[8,1], index: 3, kind: output, shape index: {1}]
  %4 = xla_tuple %s2, %s3
  %s5 = sld [smem:[#allocation0]]
  $region61: #{tpu_custom_call.1} parent=0
    _
  %s7 = ssub.s32 1, %s5
  %s8 = scalar_select 0, %s7, %s5
  $region1: #{tpu_custom_call.1} parent=0
    #allocation2 [shape = 'u8[8192]{0}', space=vmem, size = 0x2000, scoped, tag = 'input window, operand 0']
    #allocation3 [shape = 's32[2]{0}', space=sflag, size = 0x8, scoped, tag = 'scoped memory for tpu_custom_call.1']
    #allocation4 [shape = 'u8[1024]{0}', space=vmem, size = 0x400, scoped, tag = 'input window, operand 1']
    #allocation5 [shape = 's32[2]{0}', space=sflag, size = 0x8, scoped, tag = 'scoped memory for tpu_custom_call.1']
    %9 = vsyncpa [#allocation3], 0
    %s10 = scalar_lea.sflag [#allocation3], 1
    %11 = vsyncpa %s10, 0
    %12 = vsyncpa [#allocation5], 0
    %s13 = scalar_lea.sflag [#allocation5], 1
    %14 = vsyncpa %s13, 0
    loop: start=0, step=1, limit=4
    $region2: #{tpu_custom_call.1} parent=1 // loop_pre_header
      _
    $region3: #{tpu_custom_call.1} parent=1 // loop_header
      %s16 = sphi 0, %s20
      %p17 = scmp.ge.s32.totalorder %s16, 4
      %s23 = sphi 0, %s35
      %s24 = sphi 0, %s31
      %s25 = sphi 0, %s23
      %s26 = sphi 0, %s24
      %s27 = sphi 0, %s25
      %s28 = sphi 0, %s26
      %s40 = sphi 0, %s42
      %s43 = sphi 0, %s40
      %s44 = sphi 0, %s43
      %s60 = sphi 0, %s44
      %s68 = sphi 0, %s70
      %s71 = sphi 0, %s68
      %s72 = sphi 0, %s71
      %s88 = sphi 0, %s72
      %s92 = sphi 0, %s92
      %s94 = sphi 0, %s92
      %s95 = sphi 0, %s94
      %s109 = sphi 0, %s95
      %s113 = sphi 0, %s113
      %s115 = sphi 0, %s113
      %s116 = sphi 0, %s115
      %s130 = sphi 0, %s116
    $region4: #{tpu_custom_call.1} parent=1 // loop_header_branch
      %19 = sbr.rel (%p17) target = $region8
    $region5: #{tpu_custom_call.1} parent=1 // loop_body
      %s21 = ssub.s32 %s16, 1
      %s22 = ssub.s32 %s16, 2
      %s29 = sadd.s32 1, %s24
      %p30 = scmp.ge.s32.totalorder %s29, 1
      %s31 = scalar_select %p30, 0, %s29
      %s32 = sadd.s32 1, %s23
      %s33 = scalar_select %p30, %s32, %s23
      %p34 = scmp.ge.s32.totalorder %s33, 2
      %s35 = scalar_select %p34, 0, %s33
      %s36 = ssub.s32 %s23, %s35
      %s37 = ssub.s32 %s24, %s31
      %s38 = sor.u32 %s36, %s37
      %p39 = scmp.eq.s32.totalorder %s38, 0
      %s41 = sadd.s32 %s40, 1
      %s42 = scalar_select %p39, %s40, %s41
      %p45 = pneg %p39
      %p46 = scmp.eq.s32.totalorder %s16, 1
      %p47 = por %p45, %p46
      %p48 = scmp.ne.s32.totalorder %s40, %s43
      %p49 = scmp.eq.s32.totalorder %s16, 0
      %p50 = por %p48, %p49
      %p51 = scmp.ne.s32.totalorder %s40, %s43
      %p52 = scmp.eq.s32.totalorder %s21, 1
      %p53 = por %p51, %p52
      %p54 = scmp.ne.s32.totalorder %s43, %s44
      %p55 = scmp.eq.s32.totalorder %s21, 0
      %p56 = por %p54, %p55
      %p57 = scmp.ne.s32.totalorder %s43, %s44
      %p58 = scmp.eq.s32.totalorder %s22, 1
      %p59 = por %p57, %p58
      %p61 = scmp.ne.s32.totalorder %s44, %s60
      %p62 = scmp.eq.s32.totalorder %s22, 0
      %p63 = por %p61, %p62
      %s64 = ssub.s32 %s23, %s35
      %s65 = ssub.s32 %s24, %s31
      %s66 = sor.u32 %s64, %s65
      %p67 = scmp.eq.s32.totalorder %s66, 0
      %s69 = sadd.s32 %s68, 1
      %s70 = scalar_select %p67, %s68, %s69
      %p73 = pneg %p67
      %p74 = scmp.eq.s32.totalorder %s16, 1
      %p75 = por %p73, %p74
      %p76 = scmp.ne.s32.totalorder %s68, %s71
      %p77 = scmp.eq.s32.totalorder %s16, 0
      %p78 = por %p76, %p77
      %p79 = scmp.ne.s32.totalorder %s68, %s71
      %p80 = scmp.eq.s32.totalorder %s21, 1
      %p81 = por %p79, %p80
      %p82 = scmp.ne.s32.totalorder %s71, %s72
      %p83 = scmp.eq.s32.totalorder %s21, 0
      %p84 = por %p82, %p83
      %p85 = scmp.ne.s32.totalorder %s71, %s72
      %p86 = scmp.eq.s32.totalorder %s22, 1
      %p87 = por %p85, %p86
      %p89 = scmp.ne.s32.totalorder %s72, %s88
      %p90 = scmp.eq.s32.totalorder %s22, 0
      %p91 = por %p89, %p90
      %s93 = sadd.s32 %s92, 1
      %p96 = scmp.eq.s32.totalorder %s16, 1
      %p97 = scmp.ne.s32.totalorder %s92, %s94
      %p98 = scmp.eq.s32.totalorder %s16, 0
      %p99 = por %p97, %p98
      %p100 = scmp.ne.s32.totalorder %s92, %s94
      %p101 = scmp.eq.s32.totalorder %s21, 1
      %p102 = por %p100, %p101
      %p103 = scmp.ne.s32.totalorder %s94, %s95
      %p104 = scmp.eq.s32.totalorder %s21, 0
      %p105 = por %p103, %p104
      %p106 = scmp.ne.s32.totalorder %s94, %s95
      %p107 = scmp.eq.s32.totalorder %s22, 1
      %p108 = por %p106, %p107
      %p110 = scmp.ne.s32.totalorder %s95, %s109
      %p111 = scmp.eq.s32.totalorder %s22, 0
      %p112 = por %p110, %p111
      %s114 = sadd.s32 %s113, 1
      %p117 = scmp.eq.s32.totalorder %s16, 1
      %p118 = scmp.ne.s32.totalorder %s113, %s115
      %p119 = scmp.eq.s32.totalorder %s16, 0
      %p120 = por %p118, %p119
      %p121 = scmp.ne.s32.totalorder %s113, %s115
      %p122 = scmp.eq.s32.totalorder %s21, 1
      %p123 = por %p121, %p122
      %p124 = scmp.ne.s32.totalorder %s115, %s116
      %p125 = scmp.eq.s32.totalorder %s21, 0
      %p126 = por %p124, %p125
      %p127 = scmp.ne.s32.totalorder %s115, %s116
      %p128 = scmp.eq.s32.totalorder %s22, 1
      %p129 = por %p127, %p128
      %p131 = scmp.ne.s32.totalorder %s116, %s130
      %p132 = scmp.eq.s32.totalorder %s22, 0
      %p133 = por %p131, %p132
      %p134 = scmp.le.s32.totalorder 1, %s16
      %p135 = scmp.lt.s32.totalorder %s16, 3
      %p136 = pnand %p134, %p135
      %p137 = pneg %p136
      // Predicated region
      $region9: #{tpu_custom_call.1} parent=5 // pred_check
        _
      $region10: #{tpu_custom_call.1} parent=5 // pred_check_branch
        %139 = sbr.rel (%p136) target = $region12
      $region11: #{tpu_custom_call.1} parent=5 // pred_region
        %s140 = ssub.s32 %s16, 1
      $region12: #{tpu_custom_call.1} parent=5 // pred_fallthru
        _
      %p141 = scmp.lt.s32.totalorder %s16, 2
      // Predicated region
      $region13: #{tpu_custom_call.1} parent=5 // pred_check
        %p142 = pneg %p141
      $region14: #{tpu_custom_call.1} parent=5 // pred_check_branch
        %144 = sbr.rel (%p142) target = $region16
      $region15: #{tpu_custom_call.1} parent=5 // pred_region
        // Predicated region
        $region17: #{tpu_custom_call.1} parent=15 // pred_check
          %p145 = pneg %p50
        $region18: #{tpu_custom_call.1} parent=15 // pred_check_branch
          %147 = sbr.rel (%p145) target = $region20
        $region19: #{tpu_custom_call.1} parent=15 // pred_region
          %s148 = sand.u32 %s40, 1
          %s149 = scalar_lea.sflag [#allocation3], %s148
          %s150 = sand.u32 %s40, 1
          %s151 = smul.addr %s150, 8
          %s152 = scalar_lea.vmem [#allocation2], %s151
          %s154 = ssub.s32 128, 128
          %155 = vsyncadd %s149, %s154
          %s156 = sadd.s32 %s24, %s23
          %s157 = smul.addr %s156, 128
          %s158 = scalar_lea.hbm %s0, %s157
          %s160 = sshll.u32 %s152, 4
          %s161 = int_to_ptr.vmem [resolvable:$true] %s160
          %163 = dma.hbm_to_vmem [thread:$0]  %s158, 128, %s161, %s149
        $region20: #{tpu_custom_call.1} parent=15 // pred_fallthru
          _
        // Predicated region
        $region21: #{tpu_custom_call.1} parent=15 // pred_check
          %p164 = pneg %p78
        $region22: #{tpu_custom_call.1} parent=15 // pred_check_branch
          %166 = sbr.rel (%p164) target = $region24
        $region23: #{tpu_custom_call.1} parent=15 // pred_region
          %s167 = sand.u32 %s68, 1
          %s168 = scalar_lea.sflag [#allocation5], %s167
          %s169 = sand.u32 %s68, 1
          %s170 = scalar_lea.vmem [#allocation4], %s169
          %s172 = ssub.s32 16, 16
          %173 = vsyncadd %s168, %s172
          %s174 = sadd.s32 %s24, %s23
          %s175 = smul.addr %s174, 16
          %s176 = scalar_lea.hbm %s1, %s175
          %s178 = sshll.u32 %s170, 4
          %s179 = int_to_ptr.vmem [resolvable:$true] %s178
          %181 = dma.hbm_to_vmem [thread:$0]  %s176, 16, %s179, %s168
        $region24: #{tpu_custom_call.1} parent=15 // pred_fallthru
          _
      $region16: #{tpu_custom_call.1} parent=5 // pred_fallthru
        _
      %p182 = scmp.le.s32.totalorder 1, %s16
      %p183 = scmp.lt.s32.totalorder %s16, 3
      %p184 = pnand %p182, %p183
      %p185 = pneg %p184
      // Predicated region
      $region25: #{tpu_custom_call.1} parent=5 // pred_check
        _
      $region26: #{tpu_custom_call.1} parent=5 // pred_check_branch
        %187 = sbr.rel (%p184) target = $region28
      $region27: #{tpu_custom_call.1} parent=5 // pred_region
        %s188 = ssub.s32 %s16, 1
        %s189 = sand.u32 %s43, 1
        %s190 = scalar_lea.sflag [#allocation3], %s189
        %s191 = sand.u32 %s43, 1
        %s192 = smul.addr %s191, 8
        %s193 = scalar_lea.vmem [#allocation2], %s192
        // Predicated region
        $region29: #{tpu_custom_call.1} parent=27 // pred_check
          %p194 = pneg %p56
        $region30: #{tpu_custom_call.1} parent=27 // pred_check_branch
          %196 = sbr.rel (%p194) target = $region32
        $region31: #{tpu_custom_call.1} parent=27 // pred_region
          %197 = dma.done %s190, 128
        $region32: #{tpu_custom_call.1} parent=27 // pred_fallthru
          _
        %s198 = sand.u32 %s71, 1
        %s199 = scalar_lea.sflag [#allocation5], %s198
        %s200 = sand.u32 %s71, 1
        %s201 = scalar_lea.vmem [#allocation4], %s200
        // Predicated region
        $region33: #{tpu_custom_call.1} parent=27 // pred_check
          %p202 = pneg %p84
        $region34: #{tpu_custom_call.1} parent=27 // pred_check_branch
          %204 = sbr.rel (%p202) target = $region36
        $region35: #{tpu_custom_call.1} parent=27 // pred_region
          %205 = dma.done %s199, 16
        $region36: #{tpu_custom_call.1} parent=27 // pred_fallthru
          _
        %s206 = sand.u32 %s43, 1
        %s207 = scalar_lea.sflag [#allocation3], %s206
        %s208 = sand.u32 %s43, 1
        %s209 = smul.addr %s208, 8
        %s210 = scalar_lea.vmem [#allocation2], %s209
        %p211 = pneg %p56
        %p212 = pneg %p53
        %s213 = sand.u32 %s71, 1
        %s214 = scalar_lea.sflag [#allocation5], %s213
        %s215 = sand.u32 %s71, 1
        %s216 = scalar_lea.vmem [#allocation4], %s215
        %p217 = pneg %p84
        %p218 = pneg %p81
        %p219 = pneg %p105
        %p220 = pneg %p102
        %p221 = pneg %p126
        %p222 = pneg %p123
        %p223 = scmp.eq.s32.totalorder %s25, 0
        %p224 = scmp.eq.s32.totalorder %s26, 0
        %p225 = pnand %p223, %p224
        %p226 = pneg %p225
        // Predicated region
        $region37: #{tpu_custom_call.1} parent=27 // pred_check
          _
        $region38: #{tpu_custom_call.1} parent=27 // pred_check_branch
          %228 = sbr.rel (%p225) target = $region40
        $region39: #{tpu_custom_call.1} parent=27 // pred_region
          %vm229 = vcmask 7168
          %230 = vst.msk [vmem:[%s2] sm:$0xff] %vm229, 0.0
          %231 = vst.msk [vmem:[%s3] sm:$0xff] %vm229, 0.0
        $region40: #{tpu_custom_call.1} parent=27 // pred_fallthru
          _
        %v232 = vld [vmem:[%s193] sm:$0xff]
        %v233 = vld [vmem:[%s201] sm:$0x1]
        %v235 = vlaneseq
        %v236 = vshrl.u32 %v235, 7
        %v237 = vsub.s32 0, %v236
        %v238 = vrot.slane %v233, %v237
        %v240 = vmul.f32 %v232, %v238
        %v241 = vld [vmem:[%s2] sm:$0xff]
        %242 = vadd.xlane.f32.xlu0 %v240
        %v243 = vpop.xlane.xlu0 %242
        %v244 = vadd.f32 %v241, %v243
        %vm245 = vcmask 7168
        %246 = vst.msk [vmem:[%s2] sm:$0xff] %vm245, %v244
        %v247 = vld [vmem:[%s3] sm:$0xff]
        %v248 = vmul.f32 %v240, %v232
        %249 = vadd.xlane.f32.xlu0 %v248
        %v250 = vpop.xlane.xlu0 %249
        %v251 = vadd.f32 %v247, %v250
        %252 = vst.msk [vmem:[%s3] sm:$0xff] %vm245, %v251
        // Predicated region
        $region41: #{tpu_custom_call.1} parent=27 // pred_check
          %p253 = pneg %p102
        $region42: #{tpu_custom_call.1} parent=27 // pred_check_branch
          %255 = sbr.rel (%p253) target = $region44
        $region43: #{tpu_custom_call.1} parent=27 // pred_region
          _
        $region44: #{tpu_custom_call.1} parent=27 // pred_fallthru
          _
        // Predicated region
        $region45: #{tpu_custom_call.1} parent=27 // pred_check
          %p256 = pneg %p123
        $region46: #{tpu_custom_call.1} parent=27 // pred_check_branch
          %258 = sbr.rel (%p256) target = $region48
        $region47: #{tpu_custom_call.1} parent=27 // pred_region
          _
        $region48: #{tpu_custom_call.1} parent=27 // pred_fallthru
          _
        // Predicated region
        $region49: #{tpu_custom_call.1} parent=27 // pred_check
          %p259 = pneg %p102
        $region50: #{tpu_custom_call.1} parent=27 // pred_check_branch
          %261 = sbr.rel (%p259) target = $region52
        $region51: #{tpu_custom_call.1} parent=27 // pred_region
          _
        $region52: #{tpu_custom_call.1} parent=27 // pred_fallthru
          _
        // Predicated region
        $region53: #{tpu_custom_call.1} parent=27 // pred_check
          %p262 = pneg %p123
        $region54: #{tpu_custom_call.1} parent=27 // pred_check_branch
          %264 = sbr.rel (%p262) target = $region56
        $region55: #{tpu_custom_call.1} parent=27 // pred_region
          _
        $region56: #{tpu_custom_call.1} parent=27 // pred_fallthru
          _
      $region28: #{tpu_custom_call.1} parent=5 // pred_fallthru
        _
      %p265 = scmp.le.s32.totalorder 2, %s16
      // Predicated region
      $region57: #{tpu_custom_call.1} parent=5 // pred_check
        %p266 = pneg %p265
      $region58: #{tpu_custom_call.1} parent=5 // pred_check_branch
        %268 = sbr.rel (%p266) target = $region60
      $region59: #{tpu_custom_call.1} parent=5 // pred_region
        %s269 = ssub.s32 %s16, 2
      $region60: #{tpu_custom_call.1} parent=5 // pred_fallthru
        _
    $region6: #{tpu_custom_call.1} parent=1 // loop_footer
      %s20 = sadd.s32 1, %s16
    $region7: #{tpu_custom_call.1} parent=1 // loop_footer_branch
      %15 = sbr.rel target = $region3
    $region8: #{tpu_custom_call.1} parent=1 // loop_exit
      _
    %270 = vsyncpa [#allocation3], 1
    %s271 = scalar_lea.sflag [#allocation3], 1
    %272 = vsyncpa %s271, 1
    %273 = vsyncpa [#allocation5], 1
    %s274 = scalar_lea.sflag [#allocation5], 1
    %275 = vsyncpa %s274, 1

</llo_original>
